<compile_context>
chip_gen: v5e
topology: v5e:2x2
jax: 0.10.0
libtpu: 0.0.40
codegen_flags: <defaults>
</compile_context>

<pallas_src>
import jax
import jax.numpy as jnp
from jax.experimental import pallas as pl
from jax.experimental.pallas import tpu as pltpu

_DEFAULT_VMEM_BUDGET = 24 << 20  # target total per-step pipeline footprint (bytes)


def _adain_kernel(x_ref, sb_ref, o_ref):
    # x_ref:  (TR, L)  rows = flattened (batch, channel), L on lanes
    # sb_ref: (TR, 2)  column 0 = scale, column 1 = bias
    # o_ref:  (TR, L)
    x = x_ref[...]
    L = x.shape[-1]
    xf = x.astype(jnp.float32)

    # Single-pass statistics, f32-accumulated: one reduction sweep over x and
    # x*x, no materialized `diff` full-tile temp.
    s1 = jnp.sum(xf, axis=-1, keepdims=True)                      # (TR, 1)
    s2 = jnp.sum(xf * xf, axis=-1, keepdims=True)                 # (TR, 1)
    mu = s1 * jnp.float32(1.0 / L)
    # torch.std default is unbiased (divide by L-1); L == 1 gives 0/0 = NaN like torch.
    var = (s2 - mu * s1) / jnp.float32(L - 1)
    # Guard E[x^2] - E[x]^2 cancellation; jnp.maximum propagates NaN so the
    # L == 1 behavior is preserved.
    var = jnp.maximum(var, jnp.float32(0.0))
    sigma = jnp.sqrt(var) + jnp.float32(1e-6)                     # (TR, 1)

    sb = sb_ref[...].astype(jnp.float32)                          # (TR, 2)
    scale = sb[:, 0:1]
    bias = sb[:, 1:2]

    # Fold scale/sigma/mu into per-row (inv, shift): out = x * inv + shift.
    inv = scale / sigma                                           # (TR, 1)
    shift = bias - mu * inv                                       # (TR, 1)

    if o_ref.dtype == jnp.bfloat16:
        # bf16 VALU exists on v6e/v7x: only per-row scalars stay f32; the
        # elementwise hot path runs (and stores) in bf16.
        o_ref[...] = x * inv.astype(x.dtype) + shift.astype(x.dtype)
    else:
        o_ref[...] = (xf * inv + shift).astype(o_ref.dtype)


def _per_row_vmem_bytes(L, x_bytes, sb_bytes):
    """Honest per-row VMEM cost of adding one row to the tile."""
    return (
        2 * L * x_bytes        # input tile, double-buffered
        + 2 * L * x_bytes      # output tile, double-buffered
        + 2 * 128 * sb_bytes   # (TR, 2) scale/bias block is lane-padded to 128
        + 3 * L * 4            # in-kernel f32 temps (astype / x*x / affine)
    )


def _row_tile(R, L, x_bytes, sb_bytes, vmem_budget_bytes, min_grid_steps):
    """Rows per block: multiple of 8, whole pipeline footprint <= budget, and
    (when R allows) at least `min_grid_steps` grid steps so v7x can shard the
    parallel axis across both TensorCores."""
    per_row = _per_row_vmem_bytes(L, x_bytes, sb_bytes)
    tr = max(8, (vmem_budget_bytes // per_row) // 8 * 8)
    if min_grid_steps > 1:
        cap = max(8, (pl.cdiv(R, min_grid_steps) // 8) * 8)
        tr = min(tr, cap)
    if tr >= R:
        return R  # full dim is always a legal block shape
    return tr


def adain(x, style, *, vmem_budget_bytes=_DEFAULT_VMEM_BUDGET, min_grid_steps=4):
    """AdaIN forward.

    Args:
      x:     (B, C, L) float array.
      style: (B, 2*C) float array; per torch semantics style.view(B, C, 2)
             gives scale = style[..., 0], bias = style[..., 1] (interleaved).
    Returns:
      (B, C, L) array, same dtype as x.
    """
    B, C, L = x.shape
    R = B * C
    x2 = x.reshape(R, L)
    sb = style.reshape(R, 2)  # row r = (scale, bias) for (b, c) = divmod(r, C)

    x_bytes = x.dtype.itemsize
    sb_bytes = sb.dtype.itemsize
    TR = _row_tile(R, L, x_bytes, sb_bytes, vmem_budget_bytes, min_grid_steps)
    grid = (pl.cdiv(R, TR),)

    # Explicit scoped-VMEM limit derived from the honest footprint estimate:
    # above v5e's 16 MiB default, comfortably under v7x's 64 MiB physical.
    est = TR * _per_row_vmem_bytes(L, x_bytes, sb_bytes)
    vmem_limit = int(min(max(est + (4 << 20), 16 << 20), 48 << 20))

    out = pl.pallas_call(
        _adain_kernel,
        out_shape=jax.ShapeDtypeStruct((R, L), x.dtype),
        grid_spec=pltpu.PrefetchScalarGridSpec(
            num_scalar_prefetch=0,
            grid=grid,
            in_specs=[
                pl.BlockSpec((TR, L), lambda r: (r, 0)),
                pl.BlockSpec((TR, 2), lambda r: (r, 0)),
            ],
            out_specs=pl.BlockSpec((TR, L), lambda r: (r, 0)),
        ),
        compiler_params=pltpu.CompilerParams(
            dimension_semantics=("parallel",),
            vmem_limit_bytes=vmem_limit,
        ),
    )(x2, sb)
    return out.reshape(B, C, L)


def adain_ref(x, style):
    """Pure-JAX reference matching the PyTorch module exactly (f32 math)."""
    B, C, L = x.shape
    xf = x.astype(jnp.float32)
    style_r = style.astype(jnp.float32).reshape(B, C, 2)
    scale = style_r[:, :, 0][..., None]
    bias = style_r[:, :, 1][..., None]
    mu = jnp.mean(xf, axis=-1, keepdims=True)
    sigma = jnp.std(xf, axis=-1, keepdims=True, ddof=1) + 1e-6
    return scale * (xf - mu) / sigma + bias


if __name__ == "__main__":
    key = jax.random.PRNGKey(0)

    # --- small shape consistent with the module spec: (B, C, L) = (2, 4, 16)
    kx, ks = jax.random.split(key)
    B, C, L = 2, 4, 16
    x = jax.random.normal(kx, (B, C, L), dtype=jnp.float32)
    style = jax.random.normal(ks, (B, 2 * C), dtype=jnp.float32)

    out = jax.block_until_ready(adain(x, style))
    ref = adain_ref(x, style)
    assert out.shape == (B, C, L)
    assert jnp.allclose(out, ref, atol=1e-5, rtol=1e-5), "mismatch vs reference"

    # --- multi-tile path (grid > 1, partial last row block): force TR = 8
    kx2, ks2 = jax.random.split(ks)
    B2, C2, L2 = 3, 7, 160            # R = 21 rows, not a multiple of 8
    x2 = jax.random.normal(kx2, (B2, C2, L2), dtype=jnp.float32)
    style2 = jax.random.normal(ks2, (B2, 2 * C2), dtype=jnp.float32)
    out2 = jax.block_until_ready(adain(x2, style2, vmem_budget_bytes=64 * 1024))
    ref2 = adain_ref(x2, style2)
    assert jnp.allclose(out2, ref2, atol=1e-5, rtol=1e-5), "tiled mismatch"

    # --- bf16 path (f32-accumulated stats, bf16 elementwise epilogue)
    kx3, ks3 = jax.random.split(ks2)
    B3, C3, L3 = 2, 8, 256
    x3 = jax.random.normal(kx3, (B3, C3, L3), dtype=jnp.bfloat16)
    style3 = jax.random.normal(ks3, (B3, 2 * C3), dtype=jnp.bfloat16)
    out3 = jax.block_until_ready(adain(x3, style3))
    ref3 = adain_ref(x3, style3)
    assert out3.dtype == jnp.bfloat16
    assert jnp.allclose(out3.astype(jnp.float32), ref3, atol=1e-1, rtol=5e-2), "bf16 mismatch"

    print("KERNEL_OK")
</pallas_src>

<mosaic_0001>
module attributes {stable_mosaic.version = 11 : i64} {
  func.func @_adain_kernel(%arg0: i32, %arg1: memref<8x16xf32, #tpu.memory_space<vmem>>, %arg2: memref<8x2xf32, #tpu.memory_space<vmem>>, %arg3: memref<8x16xf32, #tpu.memory_space<vmem>>) attributes {dimension_semantics = [#tpu.dimension_semantics<parallel>], iteration_bounds = array<i64: 1>, scalar_prefetch = 0 : i64, scratch_operands = 0 : i64, tpu.core_type = #tpu.core_type<tc>, window_params = [{transform_indices = @transform_0, window_bounds = array<i64: 8, 16>}, {transform_indices = @transform_1, window_bounds = array<i64: 8, 2>}, {transform_indices = @transform_2, window_bounds = array<i64: 8, 16>}]} {
    %c0 = arith.constant 0 : index
    %c0_0 = arith.constant 0 : index
    %0 = vector.load %arg1[%c0, %c0_0] : memref<8x16xf32, #tpu.memory_space<vmem>>, vector<8x16xf32>
    %cst = arith.constant dense<0.000000e+00> : vector<8xf32>
    %1 = vector.multi_reduction <add>, %0, %cst [1] : vector<8x16xf32> to vector<8xf32>
    %2 = vector.shape_cast %1 : vector<8xf32> to vector<8x1xf32>
    %3 = arith.mulf %0, %0 : vector<8x16xf32>
    %cst_1 = arith.constant dense<0.000000e+00> : vector<8xf32>
    %4 = vector.multi_reduction <add>, %3, %cst_1 [1] : vector<8x16xf32> to vector<8xf32>
    %5 = vector.shape_cast %4 : vector<8xf32> to vector<8x1xf32>
    %cst_2 = arith.constant 6.250000e-02 : f32
    %6 = vector.broadcast %cst_2 : f32 to vector<8x1xf32>
    %7 = arith.mulf %2, %6 : vector<8x1xf32>
    %8 = arith.mulf %7, %2 : vector<8x1xf32>
    %9 = arith.subf %5, %8 : vector<8x1xf32>
    %cst_3 = arith.constant 1.500000e+01 : f32
    %10 = vector.broadcast %cst_3 : f32 to vector<8x1xf32>
    %11 = arith.divf %9, %10 : vector<8x1xf32>
    %cst_4 = arith.constant 0.000000e+00 : f32
    %12 = vector.broadcast %cst_4 : f32 to vector<8x1xf32>
    %13 = arith.maximumf %11, %12 : vector<8x1xf32>
    %14 = math.sqrt %13 : vector<8x1xf32>
    %cst_5 = arith.constant 9.99999997E-7 : f32
    %15 = vector.broadcast %cst_5 : f32 to vector<8x1xf32>
    %16 = arith.addf %14, %15 : vector<8x1xf32>
    %c0_6 = arith.constant 0 : index
    %c0_7 = arith.constant 0 : index
    %17 = vector.load %arg2[%c0_6, %c0_7] : memref<8x2xf32, #tpu.memory_space<vmem>>, vector<8x2xf32>
    %18 = vector.extract_strided_slice %17 {offsets = [0, 0], sizes = [8, 1], strides = [1, 1]} : vector<8x2xf32> to vector<8x1xf32>
    %19 = vector.extract_strided_slice %17 {offsets = [0, 1], sizes = [8, 1], strides = [1, 1]} : vector<8x2xf32> to vector<8x1xf32>
    %20 = arith.divf %18, %16 : vector<8x1xf32>
    %21 = arith.mulf %7, %20 : vector<8x1xf32>
    %22 = arith.subf %19, %21 : vector<8x1xf32>
    %23 = vector.broadcast %20 : vector<8x1xf32> to vector<8x16xf32>
    %24 = arith.mulf %0, %23 : vector<8x16xf32>
    %25 = vector.broadcast %22 : vector<8x1xf32> to vector<8x16xf32>
    %26 = arith.addf %24, %25 : vector<8x16xf32>
    %c0_8 = arith.constant 0 : index
    %c0_9 = arith.constant 0 : index
    %27 = vector.load %arg3[%c0_8, %c0_9] : memref<8x16xf32, #tpu.memory_space<vmem>>, vector<8x16xf32>
    tpu.vector_store %arg3[%c0_8, %c0_9], %26 {strides = array<i32>} : memref<8x16xf32, #tpu.memory_space<vmem>>, vector<8x16xf32>,
    return
  }
  func.func @transform_0(%arg0: i32) -> (i32, i32) {
    %c0_i32 = arith.constant 0 : i32
    %c0_i32_0 = arith.constant 0 : i32
    return %arg0, %c0_i32 : i32, i32
  }
  func.func @transform_1(%arg0: i32) -> (i32, i32) {
    %c0_i32 = arith.constant 0 : i32
    %c0_i32_0 = arith.constant 0 : i32
    return %arg0, %c0_i32 : i32, i32
  }
  func.func @transform_2(%arg0: i32) -> (i32, i32) {
    %c0_i32 = arith.constant 0 : i32
    %c0_i32_0 = arith.constant 0 : i32
    return %arg0, %c0_i32 : i32, i32
  }
}

</mosaic_0001>

<llo_original>
// kernel: tpu_custom_call.1
$region0: #{tpu_custom_call.1}
  #allocation0 [shape = 'u32[]', space=smem, size = 0x4, offset = 0x4, fixed_abs, tag = 'smem constant byte address 0x4 - core index']
  #allocation1 [shape = 'u32[72,128]{1,0:T(1,128)}', space=vmem, size = 0x9000, scoped, tag = 'internal scratch']
  %s0 = inlined_call_operand.vmem [shape: f32[8,16], index: 0, kind: input, shape index: {}]
  %s1 = inlined_call_operand.vmem [shape: f32[8,2], index: 1, kind: input, shape index: {}]
  %s2 = inlined_call_operand.hbm [shape: f32[8,16], index: 2, kind: output, shape index: {}]
  %s3 = sld [smem:[#allocation0]]
  $region18: #{tpu_custom_call.1} parent=0
    _
  %s5 = ssub.s32 1, %s3
  %s6 = scalar_select 0, %s5, %s3
  $region1: #{tpu_custom_call.1} parent=0
    #allocation2 [shape = 'u8[4096]{0}', space=vmem, size = 0x1000, scoped, tag = 'output window, operand 0, single buffered']
    #allocation3 [shape = 's32[1]{0}', space=sflag, size = 0x4, scoped, tag = 'scoped memory for tpu_custom_call.1']
    %7 = vsyncpa [#allocation3], 0
    // Predicated region
    $region2: #{tpu_custom_call.1} parent=1 // pred_check
      _
    $region3: #{tpu_custom_call.1} parent=1 // pred_check_branch
      %9 = sbr.rel (0) target = $region5
    $region4: #{tpu_custom_call.1} parent=1 // pred_region
      _
    $region5: #{tpu_custom_call.1} parent=1 // pred_fallthru
      _
    // Predicated region
    $region6: #{tpu_custom_call.1} parent=1 // pred_check
      _
    $region7: #{tpu_custom_call.1} parent=1 // pred_check_branch
      %11 = sbr.rel (0) target = $region9
    $region8: #{tpu_custom_call.1} parent=1 // pred_region
      _
    $region9: #{tpu_custom_call.1} parent=1 // pred_fallthru
      _
    %v12 = vld [vmem:[%s0] sm:$0xff]
    %vm13 = vcmask 130048
    %v14 = vsel %vm13, %v12, 0.0
    %15 = vadd.xlane.f32.xlu0 %v14
    %v16 = vpop.xlane.xlu0 %15
    %v17 = vmul.f32 %v12, %v12
    %v18 = vsel %vm13, %v17, 0.0
    %19 = vadd.xlane.f32.xlu0 %v18
    %v20 = vpop.xlane.xlu0 %19
    %v21 = vmul.f32 %v16, 0.0625
    %v22 = vmul.f32 %v21, %v16
    %v23 = vsub.f32 %v20, %v22
    %v24 = vrcp.pop 15.0
    %v25 = vmul.f32 15.0, %v24
    %v26 = vsub.f32 1.0, %v25
    %v27 = vmul.f32 %v24, %v26
    %v28 = vadd.f32 %v24, %v27
    %vm29 = vweird.f32 %v24
    %v30 = vsel %vm29, %v24, %v28
    %v31 = vmul.f32 %v23, %v30
    %v32 = vmax.f32 %v31, 0.0
    %v33 = vrsqrt.pop %v32
    %v34 = vmul.f32 %v33, %v32
    %v35 = vmul.f32 %v34, %v33
    %v36 = vmul.f32 0.5, %v35
    %v37 = vsub.f32 1.5, %v36
    %v38 = vmul.f32 %v33, %v37
    %v39 = vmul.f32 %v32, %v38
    %vm40 = vcmp.eq.f32.partialorder %v32, inf
    %v41 = vsel %vm40, %v32, %v39
    %vm42 = vcmp.eq.f32.partialorder %v32, 0.0
    %v43 = vand.u32 %v32, 2147483648
    %v44 = vsel %vm42, %v43, %v41
    %v45 = vadd.f32 %v44, 1e-06
    %v46 = vld [vmem:[%s1] sm:$0xff]
    %v47 = vrcp.pop %v45
    %v48 = vmul.f32 %v45, %v47
    %v49 = vsub.f32 1.0, %v48
    %v50 = vmul.f32 %v47, %v49
    %v51 = vadd.f32 %v47, %v50
    %vm52 = vweird.f32 %v45
    %vm53 = vweird.f32 %v47
    %vm54 = vmor %vm52, %vm53
    %v55 = vsel %vm54, %v47, %v51
    %v56 = vand.u32 2147483647, %v45
    %vm57 = vcmp.eq.f32.partialorder %v56, 8.507059e+37
    %v58 = vand.u32 %v45, 2147483648
    %v59 = vor.u32 1.1754944e-38, %v58
    %v60 = vsel %vm57, %v59, %v55
    %v61 = vmul.f32 %v46, %v60
    %v62 = vmul.f32 %v21, %v61
    %64 = vrot.lane.b32.xlu0 %v62, 1
    %v65 = vpop.permute.xlu0 %64
    %v67 = vsub.f32 %v46, %v65
    %69 = vset.pattern.permute.xlu0 0
    %70 = vperm.xlu0 %69, %v61
    %v71 = vpop.permute.xlu0 %70
    %v73 = vmul.f32 %v12, %v71
    %75 = vset.pattern.permute.xlu0 1
    %76 = vperm.xlu0 %75, %v67
    %v77 = vpop.permute.xlu0 %76
    %v79 = vadd.f32 %v73, %v77
    %80 = vst.msk [vmem:[#allocation2] sm:$0xff] %vm13, %v79
    // Predicated region
    $region10: #{tpu_custom_call.1} parent=1 // pred_check
      _
    $region11: #{tpu_custom_call.1} parent=1 // pred_check_branch
      %82 = sbr.rel (0) target = $region13
    $region12: #{tpu_custom_call.1} parent=1 // pred_region
      %84 = vsyncadd [#allocation3], 0
      %s86 = sshll.u32 [#allocation2], 4
      %s87 = int_to_ptr.vmem [resolvable:$true] %s86
      %s88 = sshll.u32 %s2, 4
      %s89 = int_to_ptr.hbm [resolvable:$true] %s88
      %91 = dma.vmem_to_hbm [thread:$0]  %s87, 128, %s89, [#allocation3]
    $region13: #{tpu_custom_call.1} parent=1 // pred_fallthru
      _
    // Predicated region
    $region14: #{tpu_custom_call.1} parent=1 // pred_check
      _
    $region15: #{tpu_custom_call.1} parent=1 // pred_check_branch
      %93 = sbr.rel (0) target = $region17
    $region16: #{tpu_custom_call.1} parent=1 // pred_region
      %95 = dma.done [#allocation3], 128
    $region17: #{tpu_custom_call.1} parent=1 // pred_fallthru
      _
    %96 = vsyncpa [#allocation3], 1

</llo_original>
